<compile_context>
chip_gen: v5e
topology: v5e:2x2
jax: 0.10.0
libtpu: 0.0.40
codegen_flags: <defaults>
</compile_context>

<pallas_src>
import functools

import jax
import jax.numpy as jnp
from jax.experimental import pallas as pl
from jax.experimental.pallas import tpu as pltpu


def _round_up(n, m):
    return ((n + m - 1) // m) * m


def ppo_kernel(x_ref, w1_ref, b1_ref, w2_ref, b2_ref, wh_ref, bh_ref,
               out_ref, *, action_size):
    # Shared MLP trunk (Linear + ReLU) x 2 — MXU matmuls, VPU elementwise.
    h = jnp.dot(x_ref[...], w1_ref[...], preferred_element_type=jnp.float32)
    h = jnp.maximum(h + b1_ref[...], 0.0)
    h = jnp.dot(h.astype(w2_ref.dtype), w2_ref[...],
                preferred_element_type=jnp.float32)
    h = jnp.maximum(h + b2_ref[...], 0.0)

    # Fused actor+critic head: one lane-dense 128-wide matmul instead of
    # separate N=8 (actor) and N=1 (critic) matmuls with masked stores.
    # Columns [0:A] = actor logits, column A = critic value, rest = padding.
    fused = jnp.dot(h.astype(wh_ref.dtype), wh_ref[...],
                    preferred_element_type=jnp.float32) + bh_ref[...]

    col = jax.lax.broadcasted_iota(jnp.int32, fused.shape, dimension=1)
    actor_mask = col < action_size

    # Numerically-stable softmax restricted to the actor lanes.
    # NOTE: the post-exp jnp.where is load-bearing — padding lanes (fused=0)
    # can transiently overflow in exp when all actor logits are very negative;
    # the where zeroes them before the sum.  Do not "simplify" this.
    masked_logits = jnp.where(actor_mask, fused, -jnp.inf)
    m = jnp.max(masked_logits, axis=-1, keepdims=True)
    e = jnp.where(actor_mask, jnp.exp(fused - m), 0.0)
    s = jnp.sum(e, axis=-1, keepdims=True)
    probs = e * pl.reciprocal(s, approx=False)  # exact: keeps 1e-5 sum-to-1 check

    # Lane-dense [TB, 128] output: probs | value | zeros.  Unmasked vst.
    out = jnp.where(actor_mask, probs,
                    jnp.where(col == action_size, fused, 0.0))
    out_ref[...] = out.astype(out_ref.dtype)


def _ppo_forward_impl(x, params, *, block_b=1024, use_bf16=False):
    """x: [B, state_size] float32.  params: dict incl. pre-fused wh/bh.

    Returns (action_probs [B, A], state_value [B, 1])."""
    B, S = x.shape
    A = params["wa"].shape[1]
    H1 = params["w1"].shape[1]
    H2 = params["w2"].shape[1]
    HEAD = params["wh"].shape[1]

    # Batch tiling: multiple of 8 sublanes.  Prefer >=2 grid steps so the
    # "parallel" batch axis can engage both TensorCores on v7x; default 1024
    # keeps per-step HBM traffic well above the ~0.35us fixed per-step cost
    # while staying far under v5e's VMEM (footprint ~= TB * 2.5 KB per step).
    TB = max(8, min(block_b, _round_up((B + 1) // 2, 8)))
    grid = (pl.cdiv(B, TB),)  # ragged trailing block is masked by Pallas

    w1, w2, wh = params["w1"], params["w2"], params["wh"]
    out_dtype = jnp.float32
    if use_bf16:
        # bf16 operands / output, f32 accumulation (breaks exact f32 parity).
        x = x.astype(jnp.bfloat16)
        w1 = w1.astype(jnp.bfloat16)
        w2 = w2.astype(jnp.bfloat16)
        wh = wh.astype(jnp.bfloat16)
        out_dtype = jnp.bfloat16

    itemsize = 2 if use_bf16 else 4
    cost = pl.CostEstimate(
        flops=2 * B * (S * H1 + H1 * H2 + H2 * HEAD),
        transcendentals=B * HEAD,
        bytes_accessed=(B * S * itemsize + B * HEAD * itemsize
                        + (S * H1 + H1 * H2 + H2 * HEAD) * itemsize
                        + (H1 + H2 + HEAD) * 4),
    )

    kernel = functools.partial(ppo_kernel, action_size=A)

    fused = pl.pallas_call(
        kernel,
        out_shape=jax.ShapeDtypeStruct((B, HEAD), out_dtype),
        grid=grid,
        in_specs=[
            pl.BlockSpec((TB, S), lambda i: (i, 0)),     # x: batch-tiled
            pl.BlockSpec((S, H1), lambda i: (0, 0)),     # weights stay resident
            pl.BlockSpec((1, H1), lambda i: (0, 0)),
            pl.BlockSpec((H1, H2), lambda i: (0, 0)),
            pl.BlockSpec((1, H2), lambda i: (0, 0)),
            pl.BlockSpec((H2, HEAD), lambda i: (0, 0)),
            pl.BlockSpec((1, HEAD), lambda i: (0, 0)),
        ],
        out_specs=pl.BlockSpec((TB, HEAD), lambda i: (i, 0)),
        compiler_params=pltpu.CompilerParams(
            dimension_semantics=("parallel",),
            vmem_limit_bytes=32 * 1024 * 1024),
        cost_estimate=cost,
    )(x, w1, params["b1"], w2, params["b2"], wh, params["bh"])

    # These slices fuse under jit (no extra HBM passes).
    probs = fused[:, :A].astype(jnp.float32)
    value = fused[:, A:A + 1].astype(jnp.float32)
    return probs, value


ppo_forward = jax.jit(_ppo_forward_impl, static_argnames=("block_b", "use_bf16"))


def fuse_head(params):
    """Build the fused actor+critic head ONCE (not on the per-call hot path).

    Columns [0:A] hold the actor weights, column A the critic weights; the
    critic bias is folded into the fused bias row.  Lane-dense width >= 128."""
    H2, A = params["wa"].shape
    HEAD = max(128, _round_up(A + 1, 128))
    wh = jnp.zeros((H2, HEAD), jnp.float32)
    wh = wh.at[:, :A].set(params["wa"]).at[:, A:A + 1].set(params["wc"])
    bh = jnp.zeros((1, HEAD), jnp.float32)
    bh = bh.at[:, :A].set(params["ba"][0]).at[:, A:A + 1].set(params["bc"][0])
    out = dict(params)
    out["wh"] = wh
    out["bh"] = bh
    return out


def init_params(state_size, action_size, hidden_dims=(128, 128), seed=0):
    """Deterministic synthetic parameter init (matches nn.Linear shapes,
    stored as [in, out] so the kernel computes x @ W + b)."""
    key = jax.random.PRNGKey(seed)
    dims = [state_size] + list(hidden_dims)
    params = {}
    keys = jax.random.split(key, 2 * len(hidden_dims) + 4)
    k_i = 0
    for li, (din, dout) in enumerate(zip(dims[:-1], dims[1:]), start=1):
        scale = 1.0 / jnp.sqrt(din)
        params[f"w{li}"] = scale * jax.random.normal(keys[k_i], (din, dout), jnp.float32); k_i += 1
        params[f"b{li}"] = scale * jax.random.normal(keys[k_i], (1, dout), jnp.float32); k_i += 1
    dlast = dims[-1]
    scale = 1.0 / jnp.sqrt(dlast)
    params["wa"] = scale * jax.random.normal(keys[k_i], (dlast, action_size), jnp.float32); k_i += 1
    params["ba"] = scale * jax.random.normal(keys[k_i], (1, action_size), jnp.float32); k_i += 1
    params["wc"] = scale * jax.random.normal(keys[k_i], (dlast, 1), jnp.float32); k_i += 1
    params["bc"] = scale * jax.random.normal(keys[k_i], (1, 1), jnp.float32); k_i += 1
    return fuse_head(params)  # fused head built once, outside the hot path


def ppo_forward_ref(x, p):
    h = jnp.maximum(x @ p["w1"] + p["b1"], 0.0)
    h = jnp.maximum(h @ p["w2"] + p["b2"], 0.0)
    probs = jax.nn.softmax(h @ p["wa"] + p["ba"], axis=-1)
    value = h @ p["wc"] + p["bc"]
    return probs, value


if __name__ == "__main__":
    batch, state_size, action_size = 8, 16, 8
    hidden_dims = (128, 128)

    key = jax.random.PRNGKey(0)
    x = jax.random.normal(key, (batch, state_size), jnp.float32)
    params = init_params(state_size, action_size, hidden_dims, seed=0)

    probs, value = ppo_forward(x, params)
    jax.block_until_ready((probs, value))

    # sanity check vs pure-JAX reference (exact f32 path)
    probs_ref, value_ref = ppo_forward_ref(x, params)
    assert probs.shape == (batch, action_size) and value.shape == (batch, 1)
    assert jnp.allclose(probs, probs_ref, atol=1e-5, rtol=1e-5)
    assert jnp.allclose(value, value_ref, atol=1e-5, rtol=1e-5)
    assert jnp.allclose(jnp.sum(probs, axis=-1), 1.0, atol=1e-5)

    # also exercise a batch that is not a multiple of the tile size
    # (ragged trailing grid block, no wrapper-side padding)
    x2 = jax.random.normal(jax.random.PRNGKey(1), (13, state_size), jnp.float32)
    p2, v2 = ppo_forward(x2, params)
    jax.block_until_ready((p2, v2))
    pr2, vr2 = ppo_forward_ref(x2, params)
    assert jnp.allclose(p2, pr2, atol=1e-5, rtol=1e-5)
    assert jnp.allclose(v2, vr2, atol=1e-5, rtol=1e-5)

    # bf16 fast path (looser tolerance; gated behind a flag by design)
    p3, v3 = ppo_forward(x, params, use_bf16=True)
    jax.block_until_ready((p3, v3))
    assert jnp.allclose(p3, probs_ref, atol=2e-2, rtol=2e-2)
    assert jnp.allclose(v3, value_ref, atol=2e-2, rtol=2e-2)

    print("KERNEL_OK")
</pallas_src>

<mosaic_0001>
module attributes {stable_mosaic.version = 11 : i64} {
  func.func @ppo_kernel(%arg0: i32, %arg1: memref<8x16xf32, #tpu.memory_space<vmem>>, %arg2: memref<16x128xf32, #tpu.memory_space<vmem>>, %arg3: memref<1x128xf32, #tpu.memory_space<vmem>>, %arg4: memref<128x128xf32, #tpu.memory_space<vmem>>, %arg5: memref<1x128xf32, #tpu.memory_space<vmem>>, %arg6: memref<128x128xf32, #tpu.memory_space<vmem>>, %arg7: memref<1x128xf32, #tpu.memory_space<vmem>>, %arg8: memref<8x128xf32, #tpu.memory_space<vmem>>) attributes {dimension_semantics = [#tpu.dimension_semantics<parallel>], iteration_bounds = array<i64: 1>, scalar_prefetch = 0 : i64, scratch_operands = 0 : i64, tpu.core_type = #tpu.core_type<tc>, window_params = [{transform_indices = @transform_0, window_bounds = array<i64: 8, 16>}, {pipeline_mode = #tpu.pipeline_mode<synchronous>, transform_indices = @transform_1, window_bounds = array<i64: 16, 128>}, {pipeline_mode = #tpu.pipeline_mode<synchronous>, transform_indices = @transform_2, window_bounds = array<i64: 1, 128>}, {pipeline_mode = #tpu.pipeline_mode<synchronous>, transform_indices = @transform_3, window_bounds = array<i64: 128, 128>}, {pipeline_mode = #tpu.pipeline_mode<synchronous>, transform_indices = @transform_4, window_bounds = array<i64: 1, 128>}, {pipeline_mode = #tpu.pipeline_mode<synchronous>, transform_indices = @transform_5, window_bounds = array<i64: 128, 128>}, {pipeline_mode = #tpu.pipeline_mode<synchronous>, transform_indices = @transform_6, window_bounds = array<i64: 1, 128>}, {transform_indices = @transform_7, window_bounds = array<i64: 8, 128>}]} {
    %c0 = arith.constant 0 : index
    %c0_0 = arith.constant 0 : index
    %0 = vector.load %arg1[%c0, %c0_0] : memref<8x16xf32, #tpu.memory_space<vmem>>, vector<8x16xf32>
    %c0_1 = arith.constant 0 : index
    %c0_2 = arith.constant 0 : index
    %1 = vector.load %arg2[%c0_1, %c0_2] : memref<16x128xf32, #tpu.memory_space<vmem>>, vector<16x128xf32>
    %cst = arith.constant dense<0.000000e+00> : vector<8x128xf32>
    %2 = tpu.matmul %0, %1, %cst {dimension_numbers = #tpu.dot_dimension_numbers<[1], [0], [0], [1], [0, 0, 1, 1], [], []>} : vector<8x16xf32>, vector<16x128xf32>, vector<8x128xf32> -> vector<8x128xf32>
    %c0_3 = arith.constant 0 : index
    %c0_4 = arith.constant 0 : index
    %3 = vector.load %arg3[%c0_3, %c0_4] : memref<1x128xf32, #tpu.memory_space<vmem>>, vector<1x128xf32>
    %4 = vector.broadcast %3 : vector<1x128xf32> to vector<8x128xf32>
    %5 = arith.addf %2, %4 : vector<8x128xf32>
    %cst_5 = arith.constant 0.000000e+00 : f32
    %6 = vector.broadcast %cst_5 : f32 to vector<8x128xf32>
    %7 = arith.maximumf %5, %6 : vector<8x128xf32>
    %c0_6 = arith.constant 0 : index
    %c0_7 = arith.constant 0 : index
    %8 = vector.load %arg4[%c0_6, %c0_7] : memref<128x128xf32, #tpu.memory_space<vmem>>, vector<128x128xf32>
    %cst_8 = arith.constant dense<0.000000e+00> : vector<8x128xf32>
    %9 = tpu.matmul %7, %8, %cst_8 {dimension_numbers = #tpu.dot_dimension_numbers<[1], [0], [0], [1], [0, 0, 1, 1], [], []>} : vector<8x128xf32>, vector<128x128xf32>, vector<8x128xf32> -> vector<8x128xf32>
    %c0_9 = arith.constant 0 : index
    %c0_10 = arith.constant 0 : index
    %10 = vector.load %arg5[%c0_9, %c0_10] : memref<1x128xf32, #tpu.memory_space<vmem>>, vector<1x128xf32>
    %11 = vector.broadcast %10 : vector<1x128xf32> to vector<8x128xf32>
    %12 = arith.addf %9, %11 : vector<8x128xf32>
    %cst_11 = arith.constant 0.000000e+00 : f32
    %13 = vector.broadcast %cst_11 : f32 to vector<8x128xf32>
    %14 = arith.maximumf %12, %13 : vector<8x128xf32>
    %c0_12 = arith.constant 0 : index
    %c0_13 = arith.constant 0 : index
    %15 = vector.load %arg6[%c0_12, %c0_13] : memref<128x128xf32, #tpu.memory_space<vmem>>, vector<128x128xf32>
    %cst_14 = arith.constant dense<0.000000e+00> : vector<8x128xf32>
    %16 = tpu.matmul %14, %15, %cst_14 {dimension_numbers = #tpu.dot_dimension_numbers<[1], [0], [0], [1], [0, 0, 1, 1], [], []>} : vector<8x128xf32>, vector<128x128xf32>, vector<8x128xf32> -> vector<8x128xf32>
    %c0_15 = arith.constant 0 : index
    %c0_16 = arith.constant 0 : index
    %17 = vector.load %arg7[%c0_15, %c0_16] : memref<1x128xf32, #tpu.memory_space<vmem>>, vector<1x128xf32>
    %18 = vector.broadcast %17 : vector<1x128xf32> to vector<8x128xf32>
    %19 = arith.addf %16, %18 : vector<8x128xf32>
    %20 = tpu.iota {dimensions = array<i32: 1>} : vector<8x128xi32>
    %c8_i32 = arith.constant 8 : i32
    %21 = vector.broadcast %c8_i32 : i32 to vector<8x128xi32>
    %22 = arith.cmpi slt, %20, %21 : vector<8x128xi32>
    %cst_17 = arith.constant 0xFF800000 : f32
    %23 = vector.broadcast %cst_17 : f32 to vector<8x128xf32>
    %24 = arith.select %22, %19, %23 : vector<8x128xi1>, vector<8x128xf32>
    %cst_18 = arith.constant dense<0xFF800000> : vector<8xf32>
    %25 = vector.multi_reduction <maximumf>, %24, %cst_18 [1] : vector<8x128xf32> to vector<8xf32>
    %26 = vector.shape_cast %25 : vector<8xf32> to vector<8x1xf32>
    %27 = vector.broadcast %26 : vector<8x1xf32> to vector<8x128xf32>
    %28 = arith.subf %19, %27 : vector<8x128xf32>
    %29 = math.exp %28 : vector<8x128xf32>
    %cst_19 = arith.constant 0.000000e+00 : f32
    %30 = vector.broadcast %cst_19 : f32 to vector<8x128xf32>
    %31 = arith.select %22, %29, %30 : vector<8x128xi1>, vector<8x128xf32>
    %cst_20 = arith.constant dense<0.000000e+00> : vector<8xf32>
    %32 = vector.multi_reduction <add>, %31, %cst_20 [1] : vector<8x128xf32> to vector<8xf32>
    %33 = vector.shape_cast %32 : vector<8xf32> to vector<8x1xf32>
    %34 = tpu.reciprocal %33 : vector<8x1xf32> -> vector<8x1xf32>
    %35 = vector.broadcast %34 : vector<8x1xf32> to vector<8x128xf32>
    %36 = arith.mulf %31, %35 : vector<8x128xf32>
    %c8_i32_21 = arith.constant 8 : i32
    %37 = vector.broadcast %c8_i32_21 : i32 to vector<8x128xi32>
    %38 = arith.cmpi eq, %20, %37 : vector<8x128xi32>
    %cst_22 = arith.constant 0.000000e+00 : f32
    %39 = vector.broadcast %cst_22 : f32 to vector<8x128xf32>
    %40 = arith.select %38, %19, %39 : vector<8x128xi1>, vector<8x128xf32>
    %41 = arith.select %22, %36, %40 : vector<8x128xi1>, vector<8x128xf32>
    %c0_23 = arith.constant 0 : index
    %c0_24 = arith.constant 0 : index
    %42 = vector.load %arg8[%c0_23, %c0_24] : memref<8x128xf32, #tpu.memory_space<vmem>>, vector<8x128xf32>
    tpu.vector_store %arg8[%c0_23, %c0_24], %41 {strides = array<i32>} : memref<8x128xf32, #tpu.memory_space<vmem>>, vector<8x128xf32>,
    return
  }
  func.func @transform_0(%arg0: i32) -> (i32, i32) {
    %c0_i32 = arith.constant 0 : i32
    %c0_i32_0 = arith.constant 0 : i32
    return %arg0, %c0_i32 : i32, i32
  }
  func.func @transform_1(%arg0: i32) -> (i32, i32) {
    %c0_i32 = arith.constant 0 : i32
    %c0_i32_0 = arith.constant 0 : i32
    %c0_i32_1 = arith.constant 0 : i32
    return %c0_i32, %c0_i32_0 : i32, i32
  }
  func.func @transform_2(%arg0: i32) -> (i32, i32) {
    %c0_i32 = arith.constant 0 : i32
    %c0_i32_0 = arith.constant 0 : i32
    %c0_i32_1 = arith.constant 0 : i32
    return %c0_i32, %c0_i32_0 : i32, i32
  }
  func.func @transform_3(%arg0: i32) -> (i32, i32) {
    %c0_i32 = arith.constant 0 : i32
    %c0_i32_0 = arith.constant 0 : i32
    %c0_i32_1 = arith.constant 0 : i32
    return %c0_i32, %c0_i32_0 : i32, i32
  }
  func.func @transform_4(%arg0: i32) -> (i32, i32) {
    %c0_i32 = arith.constant 0 : i32
    %c0_i32_0 = arith.constant 0 : i32
    %c0_i32_1 = arith.constant 0 : i32
    return %c0_i32, %c0_i32_0 : i32, i32
  }
  func.func @transform_5(%arg0: i32) -> (i32, i32) {
    %c0_i32 = arith.constant 0 : i32
    %c0_i32_0 = arith.constant 0 : i32
    %c0_i32_1 = arith.constant 0 : i32
    return %c0_i32, %c0_i32_0 : i32, i32
  }
  func.func @transform_6(%arg0: i32) -> (i32, i32) {
    %c0_i32 = arith.constant 0 : i32
    %c0_i32_0 = arith.constant 0 : i32
    %c0_i32_1 = arith.constant 0 : i32
    return %c0_i32, %c0_i32_0 : i32, i32
  }
  func.func @transform_7(%arg0: i32) -> (i32, i32) {
    %c0_i32 = arith.constant 0 : i32
    %c0_i32_0 = arith.constant 0 : i32
    return %arg0, %c0_i32 : i32, i32
  }
}

</mosaic_0001>

<llo_original>
// kernel: _ppo_forward_impl.1
$region0: #{_ppo_forward_impl.1}
  #allocation0 [shape = 'u32[]', space=smem, size = 0x4, offset = 0x4, fixed_abs, tag = 'smem constant byte address 0x4 - core index']
  #allocation1 [shape = 'u32[72,128]{1,0:T(1,128)}', space=vmem, size = 0x9000, scoped, tag = 'internal scratch']
  %s0 = inlined_call_operand.hbm [shape: f32[8,16], index: 0, kind: input, shape index: {}]
  %s1 = inlined_call_operand.hbm [shape: f32[16,128], index: 1, kind: input, shape index: {}]
  %s2 = inlined_call_operand.hbm [shape: f32[1,128], index: 2, kind: input, shape index: {}]
  %s3 = inlined_call_operand.hbm [shape: f32[128,128], index: 3, kind: input, shape index: {}]
  %s4 = inlined_call_operand.vmem [shape: f32[1,128], index: 4, kind: input, shape index: {}]
  %s5 = inlined_call_operand.hbm [shape: f32[128,128], index: 5, kind: input, shape index: {}]
  %s6 = inlined_call_operand.vmem [shape: f32[1,128], index: 6, kind: input, shape index: {}]
  %s7 = inlined_call_operand.vmem [shape: f32[8,128], index: 7, kind: output, shape index: {}]
  %s8 = sld [smem:[#allocation0]]
  $region58: #{_ppo_forward_impl.1} parent=0
    _
  %s10 = ssub.s32 1, %s8
  %s11 = scalar_select 0, %s10, %s8
  $region1: #{_ppo_forward_impl.1} parent=0
    #allocation2 [shape = 'u8[4096]{0}', space=vmem, size = 0x1000, scoped, tag = 'input window, operand 0, single buffered']
    #allocation3 [shape = 's32[1]{0}', space=sflag, size = 0x4, scoped, tag = 'scoped memory for _ppo_forward_impl.1']
    #allocation4 [shape = 'u8[8192]{0}', space=vmem, size = 0x2000, scoped, tag = 'input window, operand 1, single buffered']
    #allocation5 [shape = 's32[1]{0}', space=sflag, size = 0x4, scoped, tag = 'scoped memory for _ppo_forward_impl.1']
    #allocation6 [shape = 'u8[512]{0}', space=vmem, size = 0x400, scoped, tag = 'input window, operand 2, single buffered']
    #allocation7 [shape = 'u8[65536]{0}', space=vmem, size = 0x10000, scoped, tag = 'input window, operand 3, single buffered']
    #allocation8 [shape = 's32[1]{0}', space=sflag, size = 0x4, scoped, tag = 'scoped memory for _ppo_forward_impl.1']
    #allocation9 [shape = 'u8[65536]{0}', space=vmem, size = 0x10000, scoped, tag = 'input window, operand 5, single buffered']
    %12 = vsyncpa [#allocation3], 0
    %13 = vsyncpa [#allocation5], 0
    %14 = vsyncpa [#allocation8], 0
    // Predicated region
    $region2: #{_ppo_forward_impl.1} parent=1 // pred_check
      _
    $region3: #{_ppo_forward_impl.1} parent=1 // pred_check_branch
      %16 = sbr.rel (0) target = $region5
    $region4: #{_ppo_forward_impl.1} parent=1 // pred_region
      %18 = vsyncadd [#allocation3], 0
      %s20 = sshll.u32 %s0, 4
      %s21 = int_to_ptr.hbm [resolvable:$true] %s20
      %s22 = sshll.u32 [#allocation2], 4
      %s23 = int_to_ptr.vmem [resolvable:$true] %s22
      %25 = dma.hbm_to_vmem [thread:$0]  %s21, 128, %s23, [#allocation3]
    $region5: #{_ppo_forward_impl.1} parent=1 // pred_fallthru
      _
    // Predicated region
    $region6: #{_ppo_forward_impl.1} parent=1 // pred_check
      _
    $region7: #{_ppo_forward_impl.1} parent=1 // pred_check_branch
      %27 = sbr.rel (0) target = $region9
    $region8: #{_ppo_forward_impl.1} parent=1 // pred_region
      %29 = vsyncadd [#allocation5], 0
      %s30 = sshll.u32 %s1, 4
      %s31 = int_to_ptr.hbm [resolvable:$true] %s30
      %s32 = sshll.u32 [#allocation4], 4
      %s33 = int_to_ptr.vmem [resolvable:$true] %s32
      %38 = dma.hbm_to_vmem [thread:$0]  %s31, 256, %s33, [#allocation5], 128, 128, 8
    $region9: #{_ppo_forward_impl.1} parent=1 // pred_fallthru
      _
    // Predicated region
    $region10: #{_ppo_forward_impl.1} parent=1 // pred_check
      _
    $region11: #{_ppo_forward_impl.1} parent=1 // pred_check_branch
      %40 = sbr.rel (0) target = $region13
    $region12: #{_ppo_forward_impl.1} parent=1 // pred_region
      %42 = vsyncadd [#allocation5], 0
      %s44 = sshll.u32 %s2, 4
      %s45 = int_to_ptr.hbm [resolvable:$true] %s44
      %s46 = sshll.u32 [#allocation6], 4
      %s47 = int_to_ptr.vmem [resolvable:$true] %s46
      %49 = dma.hbm_to_vmem [thread:$0]  %s45, 16, %s47, [#allocation5]
    $region13: #{_ppo_forward_impl.1} parent=1 // pred_fallthru
      _
    // Predicated region
    $region14: #{_ppo_forward_impl.1} parent=1 // pred_check
      _
    $region15: #{_ppo_forward_impl.1} parent=1 // pred_check_branch
      %51 = sbr.rel (0) target = $region17
    $region16: #{_ppo_forward_impl.1} parent=1 // pred_region
      %53 = vsyncadd [#allocation8], 0
      %s54 = sshll.u32 %s3, 4
      %s55 = int_to_ptr.hbm [resolvable:$true] %s54
      %s56 = sshll.u32 [#allocation7], 4
      %s57 = int_to_ptr.vmem [resolvable:$true] %s56
      %62 = dma.hbm_to_vmem [thread:$0]  %s55, 2048, %s57, [#allocation8], 128, 128, 8
    $region17: #{_ppo_forward_impl.1} parent=1 // pred_fallthru
      _
    // Predicated region
    $region18: #{_ppo_forward_impl.1} parent=1 // pred_check
      _
    $region19: #{_ppo_forward_impl.1} parent=1 // pred_check_branch
      %64 = sbr.rel (0) target = $region21
    $region20: #{_ppo_forward_impl.1} parent=1 // pred_region
      _
    $region21: #{_ppo_forward_impl.1} parent=1 // pred_fallthru
      _
    // Predicated region
    $region22: #{_ppo_forward_impl.1} parent=1 // pred_check
      _
    $region23: #{_ppo_forward_impl.1} parent=1 // pred_check_branch
      %66 = sbr.rel (0) target = $region25
    $region24: #{_ppo_forward_impl.1} parent=1 // pred_region
      %68 = vsyncadd [#allocation8], 0
      %s69 = sshll.u32 %s5, 4
      %s70 = int_to_ptr.hbm [resolvable:$true] %s69
      %s71 = sshll.u32 [#allocation9], 4
      %s72 = int_to_ptr.vmem [resolvable:$true] %s71
      %77 = dma.hbm_to_vmem [thread:$0]  %s70, 2048, %s72, [#allocation8], 128, 128, 8
    $region25: #{_ppo_forward_impl.1} parent=1 // pred_fallthru
      _
    // Predicated region
    $region26: #{_ppo_forward_impl.1} parent=1 // pred_check
      _
    $region27: #{_ppo_forward_impl.1} parent=1 // pred_check_branch
      %79 = sbr.rel (0) target = $region29
    $region28: #{_ppo_forward_impl.1} parent=1 // pred_region
      _
    $region29: #{_ppo_forward_impl.1} parent=1 // pred_fallthru
      _
    // Predicated region
    $region30: #{_ppo_forward_impl.1} parent=1 // pred_check
      _
    $region31: #{_ppo_forward_impl.1} parent=1 // pred_check_branch
      %81 = sbr.rel (0) target = $region33
    $region32: #{_ppo_forward_impl.1} parent=1 // pred_region
      %83 = dma.done [#allocation3], 128
    $region33: #{_ppo_forward_impl.1} parent=1 // pred_fallthru
      _
    // Predicated region
    $region34: #{_ppo_forward_impl.1} parent=1 // pred_check
      _
    $region35: #{_ppo_forward_impl.1} parent=1 // pred_check_branch
      %85 = sbr.rel (0) target = $region37
    $region36: #{_ppo_forward_impl.1} parent=1 // pred_region
      %87 = dma.done [#allocation5], 256
    $region37: #{_ppo_forward_impl.1} parent=1 // pred_fallthru
      _
    // Predicated region
    $region38: #{_ppo_forward_impl.1} parent=1 // pred_check
      _
    $region39: #{_ppo_forward_impl.1} parent=1 // pred_check_branch
      %89 = sbr.rel (0) target = $region41
    $region40: #{_ppo_forward_impl.1} parent=1 // pred_region
      %91 = dma.done [#allocation5], 16
    $region41: #{_ppo_forward_impl.1} parent=1 // pred_fallthru
      _
    // Predicated region
    $region42: #{_ppo_forward_impl.1} parent=1 // pred_check
      _
    $region43: #{_ppo_forward_impl.1} parent=1 // pred_check_branch
      %93 = sbr.rel (0) target = $region45
    $region44: #{_ppo_forward_impl.1} parent=1 // pred_region
      %95 = dma.done [#allocation8], 2048
    $region45: #{_ppo_forward_impl.1} parent=1 // pred_fallthru
      _
    // Predicated region
    $region46: #{_ppo_forward_impl.1} parent=1 // pred_check
      _
    $region47: #{_ppo_forward_impl.1} parent=1 // pred_check_branch
      %97 = sbr.rel (0) target = $region49
    $region48: #{_ppo_forward_impl.1} parent=1 // pred_region
      %99 = dma.done [#allocation8], 2048
    $region49: #{_ppo_forward_impl.1} parent=1 // pred_fallthru
      _
    %v100 = vld [vmem:[#allocation2] sm:$0xff]
    %v101 = vld [vmem:[#allocation4] sm:$0xff]
    %v102 = vld [vmem:[#allocation4 + $0x8] sm:$0xff]
    %v103 = vld [vmem:[#allocation6] sm:$0x1]
    %v105 = vperm.slane %v103, 0
    %vm107 = vcmask 130048
    %v109 = vsel %vm107, %v100, 0
    %111 = vmatpush.msra.mxu0 0.0
    %112 = vmatpush.msra.mxu0 0.0
    %113 = vmatpush.msra.mxu0 0.0
    %114 = vmatpush.msra.mxu0 0.0
    %115 = vmatpush.msra.mxu0 0.0
    %116 = vmatpush.msra.mxu0 0.0
    %117 = vmatpush.msra.mxu0 0.0
    %118 = vmatpush.msra.mxu0 0.0
    %119 = vmatpush.msra.mxu0 0.0
    %120 = vmatpush.msra.mxu0 0.0
    %121 = vmatpush.msra.mxu0 0.0
    %122 = vmatpush.msra.mxu0 0.0
    %123 = vmatpush.msra.mxu0 0.0
    %124 = vmatpush.msra.mxu0 0.0
    %125 = vmatpush.msra.mxu0 %v102
    %126 = vmatpush.msra.mxu0 %v101
    %127 = vmatmul.f32.gmra.mxu0 %v109
    %v128 = vpop.f32.mrf.mxu0
    %v129 = vadd.f32 %v105, %v128
    %130 = vdwg.mxu0
    %v131 = vmax.f32 %v129, 0.0
    %v132 = vld [vmem:[#allocation7] sm:$0xff]
    %v133 = vld [vmem:[#allocation7 + $0x8] sm:$0xff]
    %v134 = vld [vmem:[#allocation7 + $0x10] sm:$0xff]
    %v135 = vld [vmem:[#allocation7 + $0x18] sm:$0xff]
    %v136 = vld [vmem:[#allocation7 + $0x20] sm:$0xff]
    %v137 = vld [vmem:[#allocation7 + $0x28] sm:$0xff]
    %v138 = vld [vmem:[#allocation7 + $0x30] sm:$0xff]
    %v139 = vld [vmem:[#allocation7 + $0x38] sm:$0xff]
    %v140 = vld [vmem:[#allocation7 + $0x40] sm:$0xff]
    %v141 = vld [vmem:[#allocation7 + $0x48] sm:$0xff]
    %v142 = vld [vmem:[#allocation7 + $0x50] sm:$0xff]
    %v143 = vld [vmem:[#allocation7 + $0x58] sm:$0xff]
    %v144 = vld [vmem:[#allocation7 + $0x60] sm:$0xff]
    %v145 = vld [vmem:[#allocation7 + $0x68] sm:$0xff]
    %v146 = vld [vmem:[#allocation7 + $0x70] sm:$0xff]
    %v147 = vld [vmem:[#allocation7 + $0x78] sm:$0xff]
    %v148 = vld [vmem:[%s4] sm:$0x1]
    %v150 = vperm.slane %v148, 0
    %152 = vmatpush.msra.mxu0 %v147
    %153 = vmatpush.msra.mxu0 %v146
    %154 = vmatpush.msra.mxu0 %v145
    %155 = vmatpush.msra.mxu0 %v144
    %156 = vmatpush.msra.mxu0 %v143
    %157 = vmatpush.msra.mxu0 %v142
    %158 = vmatpush.msra.mxu0 %v141
    %159 = vmatpush.msra.mxu0 %v140
    %160 = vmatpush.msra.mxu0 %v139
    %161 = vmatpush.msra.mxu0 %v138
    %162 = vmatpush.msra.mxu0 %v137
    %163 = vmatpush.msra.mxu0 %v136
    %164 = vmatpush.msra.mxu0 %v135
    %165 = vmatpush.msra.mxu0 %v134
    %166 = vmatpush.msra.mxu0 %v133
    %167 = vmatpush.msra.mxu0 %v132
    %168 = vmatmul.f32.gmra.mxu0 %v131
    %v169 = vpop.f32.mrf.mxu0
    %v170 = vadd.f32 %v150, %v169
    %171 = vdwg.mxu0
    %v172 = vmax.f32 %v170, 0.0
    %v173 = vld [vmem:[#allocation9] sm:$0xff]
    %v174 = vld [vmem:[#allocation9 + $0x8] sm:$0xff]
    %v175 = vld [vmem:[#allocation9 + $0x10] sm:$0xff]
    %v176 = vld [vmem:[#allocation9 + $0x18] sm:$0xff]
    %v177 = vld [vmem:[#allocation9 + $0x20] sm:$0xff]
    %v178 = vld [vmem:[#allocation9 + $0x28] sm:$0xff]
    %v179 = vld [vmem:[#allocation9 + $0x30] sm:$0xff]
    %v180 = vld [vmem:[#allocation9 + $0x38] sm:$0xff]
    %v181 = vld [vmem:[#allocation9 + $0x40] sm:$0xff]
    %v182 = vld [vmem:[#allocation9 + $0x48] sm:$0xff]
    %v183 = vld [vmem:[#allocation9 + $0x50] sm:$0xff]
    %v184 = vld [vmem:[#allocation9 + $0x58] sm:$0xff]
    %v185 = vld [vmem:[#allocation9 + $0x60] sm:$0xff]
    %v186 = vld [vmem:[#allocation9 + $0x68] sm:$0xff]
    %v187 = vld [vmem:[#allocation9 + $0x70] sm:$0xff]
    %v188 = vld [vmem:[#allocation9 + $0x78] sm:$0xff]
    %v189 = vld [vmem:[%s6] sm:$0x1]
    %v191 = vperm.slane %v189, 0
    %193 = vmatpush.msra.mxu0 %v188
    %194 = vmatpush.msra.mxu0 %v187
    %195 = vmatpush.msra.mxu0 %v186
    %196 = vmatpush.msra.mxu0 %v185
    %197 = vmatpush.msra.mxu0 %v184
    %198 = vmatpush.msra.mxu0 %v183
    %199 = vmatpush.msra.mxu0 %v182
    %200 = vmatpush.msra.mxu0 %v181
    %201 = vmatpush.msra.mxu0 %v180
    %202 = vmatpush.msra.mxu0 %v179
    %203 = vmatpush.msra.mxu0 %v178
    %204 = vmatpush.msra.mxu0 %v177
    %205 = vmatpush.msra.mxu0 %v176
    %206 = vmatpush.msra.mxu0 %v175
    %207 = vmatpush.msra.mxu0 %v174
    %208 = vmatpush.msra.mxu0 %v173
    %209 = vmatmul.f32.gmra.mxu0 %v172
    %v210 = vpop.f32.mrf.mxu0
    %v211 = vadd.f32 %v191, %v210
    %212 = vdwg.mxu0
    %v213 = vlaneseq
    %v214 = vand.u32 %v213, 127
    %vm215 = vcmp.lt.s32.totalorder %v214, 8
    %v216 = vsel %vm215, %v211, -inf
    %217 = vmax.xlane.f32.xlu0 %v216
    %v218 = vpop.xlane.xlu0 %217
    %v219 = vsub.f32 %v211, %v218
    %v220 = vmul.f32 %v219, 1.442695
    %v221 = vpow.pop %v220
    %v222 = vsel %vm215, %v221, 0.0
    %223 = vadd.xlane.f32.xlu0 %v222
    %v224 = vpop.xlane.xlu0 %223
    %v225 = vrcp.pop %v224
    %v226 = vmul.f32 %v224, %v225
    %v227 = vsub.f32 1.0, %v226
    %v228 = vmul.f32 %v225, %v227
    %v229 = vadd.f32 %v225, %v228
    %vm230 = vweird.f32 %v224
    %vm231 = vweird.f32 %v225
    %vm232 = vmor %vm230, %vm231
    %v233 = vsel %vm232, %v225, %v229
    %v234 = vand.u32 2147483647, %v224
    %vm235 = vcmp.eq.f32.partialorder %v234, 8.507059e+37
    %v236 = vand.u32 %v224, 2147483648
    %v237 = vor.u32 1.1754944e-38, %v236
    %v238 = vsel %vm235, %v237, %v233
    %v239 = vmul.f32 %v222, %v238
    %vm240 = vcmp.eq.s32.totalorder %v214, 8
    %v241 = vsel %vm240, %v211, 0.0
    %v242 = vsel %vm215, %v239, %v241
    %243 = vst [vmem:[%s7] sm:$0xff] %v242
    // Predicated region
    $region50: #{_ppo_forward_impl.1} parent=1 // pred_check
      _
    $region51: #{_ppo_forward_impl.1} parent=1 // pred_check_branch
      %245 = sbr.rel (0) target = $region53
    $region52: #{_ppo_forward_impl.1} parent=1 // pred_region
      _
    $region53: #{_ppo_forward_impl.1} parent=1 // pred_fallthru
      _
    // Predicated region
    $region54: #{_ppo_forward_impl.1} parent=1 // pred_check
      _
    $region55: #{_ppo_forward_impl.1} parent=1 // pred_check_branch
      %247 = sbr.rel (0) target = $region57
    $region56: #{_ppo_forward_impl.1} parent=1 // pred_region
      _
    $region57: #{_ppo_forward_impl.1} parent=1 // pred_fallthru
      _
    %248 = vsyncpa [#allocation3], 1
    %249 = vsyncpa [#allocation5], 1
    %250 = vsyncpa [#allocation8], 1

</llo_original>
